<compile_context>
chip_gen: v6e
topology: v6e:2x2x1
jax: 0.10.0
libtpu: 0.0.40
codegen_flags: <defaults>
</compile_context>

<pallas_src>
import functools

import jax
import jax.numpy as jnp
from jax import lax
from jax.experimental import pallas as pl
from jax.experimental.pallas import tpu as pltpu


def _round_up(x, m):
    return ((x + m - 1) // m) * m


def _cdiv(a, b):
    return (a + b - 1) // b


def _split_dot(h, w_hi, w_lo):
    """3-pass bf16 matmul (~Precision.HIGH) with f32 accumulation.

    h is f32; w_hi/w_lo are the precomputed bf16 hi/lo halves of the f32 weight.
    Drops only the (lo x lo) term (~2^-16 relative) -- far inside tolerance.
    """
    h_hi = h.astype(jnp.bfloat16)
    h_lo = (h - h_hi.astype(jnp.float32)).astype(jnp.bfloat16)
    return (jnp.dot(h_hi, w_hi, preferred_element_type=jnp.float32)
            + jnp.dot(h_lo, w_hi, preferred_element_type=jnp.float32)
            + jnp.dot(h_hi, w_lo, preferred_element_type=jnp.float32))


def _mf_siren_kernel(x_ref, *refs, in_dim, num_mid_layers, first_on_vpu):
    """refs layout (all weights frequency-folded, width hidden*F):

      first_on_vpu: [w0, b0,                 (w_hi, w_lo, b) * num_mid, w_out_hi, w_out_lo, b_out, out]
      else:         [w0_hi, w0_lo, b0,       (w_hi, w_lo, b) * num_mid, w_out_hi, w_out_lo, b_out, out]
    """
    out_ref = refs[-1]
    x = x_ref[...].astype(jnp.float32)

    if first_on_vpu:
        # Layer 0 on the VPU: exact f32, frees the MXU, no contraction-dim padding.
        w0 = refs[0][...]           # (in_dim, HF)
        b0 = refs[1][...]           # (1, HF)
        pre = b0 + x[:, 0:1] * w0[0:1, :]
        for d in range(1, in_dim):
            pre = pre + x[:, d:d + 1] * w0[d:d + 1, :]
        idx = 2
    else:
        w0_hi = refs[0][...]
        w0_lo = refs[1][...]
        b0 = refs[2][...]
        pre = _split_dot(x, w0_hi, w0_lo) + b0
        idx = 3
    h = jnp.sin(pre)

    for _ in range(num_mid_layers):
        w_hi = refs[idx][...]
        w_lo = refs[idx + 1][...]
        b = refs[idx + 2][...]
        idx += 3
        h = jnp.sin(_split_dot(h, w_hi, w_lo) + b)

    w_hi = refs[idx][...]
    w_lo = refs[idx + 1][...]
    b = refs[idx + 2][...]
    out_ref[...] = (_split_dot(h, w_hi, w_lo) + b).astype(out_ref.dtype)


def expand_params(params, frequencies):
    """One-time parameter prep (hoisted out of the per-call path).

    Folds the frequencies into each SIREN weight/bias and pre-splits every MXU
    weight into bf16 hi/lo halves for the 3-pass matmul.
    """
    freqs = tuple(float(f) for f in frequencies)
    *siren_params, (w_out, b_out) = params

    def fold(w, b):
        w = jnp.asarray(w, jnp.float32)
        b = jnp.asarray(b, jnp.float32)
        w_exp = jnp.concatenate([f * w for f in freqs], axis=-1)
        b_exp = jnp.concatenate([f * b for f in freqs], axis=-1)[None, :]
        return w_exp, b_exp

    def split(w):
        hi = w.astype(jnp.bfloat16)
        lo = (w - hi.astype(jnp.float32)).astype(jnp.bfloat16)
        return hi, lo

    arrays = []
    w0, b0 = siren_params[0]
    w0_exp, b0_exp = fold(w0, b0)
    in_dim = int(w0_exp.shape[0])
    first_on_vpu = in_dim <= 8          # SIREN coordinate inputs are tiny (2/3)
    if first_on_vpu:
        padded_in_dim = in_dim
        arrays += [w0_exp, b0_exp]
    else:
        padded_in_dim = _round_up(in_dim, 8)
        if padded_in_dim != in_dim:
            w0_exp = jnp.pad(w0_exp, ((0, padded_in_dim - in_dim), (0, 0)))
        hi, lo = split(w0_exp)
        arrays += [hi, lo, b0_exp]

    for (w, b) in siren_params[1:]:
        w_exp, b_exp = fold(w, b)
        hi, lo = split(w_exp)
        arrays += [hi, lo, b_exp]

    w_out = jnp.asarray(w_out, jnp.float32)
    b_out = jnp.asarray(b_out, jnp.float32)[None, :]
    hi, lo = split(w_out)
    arrays += [hi, lo, b_out]

    return dict(arrays=arrays,
                in_dim=in_dim,
                padded_in_dim=padded_in_dim,
                first_on_vpu=first_on_vpu,
                num_mid_layers=len(siren_params) - 1,
                hidden_freq=int(w0_exp.shape[-1]),
                out_dim=int(w_out.shape[-1]))


def multifreq_siren_forward(x, expanded, *, block_rows=4096, min_grid_steps=2):
    """Pallas forward for MultiFreqSIRENEncoder.

    x:        (B, input_dim) float32
    expanded: output of expand_params(params, frequencies)
    block_rows:     batch tile (tunable; sweep 2048-8192 on real workloads)
    min_grid_steps: keep >= 2 grid steps so "parallel" shards both v7x TensorCores.
    """
    arrays = expanded["arrays"]
    in_dim = expanded["in_dim"]
    padded_in = expanded["padded_in_dim"]
    out_dim = expanded["out_dim"]
    hf = expanded["hidden_freq"]
    num_mid = expanded["num_mid_layers"]

    B = int(x.shape[0])
    x = x.astype(jnp.float32)
    if padded_in != in_dim:             # only on the (rare) MXU first-layer path
        x = jnp.pad(x, ((0, 0), (0, padded_in - in_dim)))

    block_rows = _round_up(max(int(block_rows), 8), 8)
    tb = max(8, min(block_rows, _round_up(_cdiv(B, max(1, min_grid_steps)), 8)))
    grid = (_cdiv(B, tb),)              # ragged last block: reads padded, writes masked

    in_specs = [pl.BlockSpec((tb, padded_in), lambda i: (i, 0))]
    for a in arrays:                    # weights: full block, resident across steps
        in_specs.append(pl.BlockSpec(a.shape, lambda i: (0, 0)))

    kernel = functools.partial(_mf_siren_kernel,
                               in_dim=in_dim,
                               num_mid_layers=num_mid,
                               first_on_vpu=expanded["first_on_vpu"])

    # Advisory cost estimate (3 bf16 passes per MXU matmul; sin per SIREN layer).
    flops = 2 * B * (in_dim * hf + 3 * num_mid * hf * hf + 3 * hf * out_dim)
    transcendentals = B * hf * (1 + num_mid)
    bytes_accessed = (int(x.size) * 4 + B * out_dim * 4
                      + sum(int(a.size) * a.dtype.itemsize for a in arrays))

    return pl.pallas_call(
        kernel,
        out_shape=jax.ShapeDtypeStruct((B, out_dim), jnp.float32),
        grid=grid,
        in_specs=in_specs,
        out_specs=pl.BlockSpec((tb, out_dim), lambda i: (i, 0)),
        compiler_params=pltpu.CompilerParams(
            dimension_semantics=("parallel",),
            vmem_limit_bytes=48 * 1024 * 1024,   # safe on v5e/v6e (128 MiB) and v7x (64 MiB)
        ),
        cost_estimate=pl.CostEstimate(flops=flops,
                                      transcendentals=transcendentals,
                                      bytes_accessed=bytes_accessed),
    )(x, *arrays)


def init_params(key, input_dim, hidden_dim, output_dim, frequencies, num_layers=3):
    """Parameters matching the PyTorch module's init scheme (JAX RNG, not torch's)."""
    freq_count = len(frequencies)
    siren_in_dims = [input_dim] + [hidden_dim * freq_count] * (num_layers - 2)
    params = []
    for idx, d_in in enumerate(siren_in_dims):
        key, kw, kb = jax.random.split(key, 3)
        w_bound = (1.0 / d_in) if idx == 0 else (6.0 / d_in)
        b_bound = 1.0 / (d_in ** 0.5)            # torch nn.Linear default bias init
        w = jax.random.uniform(kw, (d_in, hidden_dim), jnp.float32, -w_bound, w_bound)
        b = jax.random.uniform(kb, (hidden_dim,), jnp.float32, -b_bound, b_bound)
        params.append((w, b))
    d_in = hidden_dim * freq_count
    key, kw, kb = jax.random.split(key, 3)
    lim = 1.0 / (d_in ** 0.5)                    # torch nn.Linear default init
    w = jax.random.uniform(kw, (d_in, output_dim), jnp.float32, -lim, lim)
    b = jax.random.uniform(kb, (output_dim,), jnp.float32, -lim, lim)
    params.append((w, b))
    return params


def _reference_forward(x, params, frequencies):
    """Pure-JAX mirror of the PyTorch forward (full-precision matmuls)."""
    *siren_params, (w_out, b_out) = params
    h = x
    for (w, b) in siren_params:
        base = jnp.dot(h, w, precision=lax.Precision.HIGHEST) + b
        h = jnp.concatenate([jnp.sin(f * base) for f in frequencies], axis=-1)
    return jnp.dot(h, w_out, precision=lax.Precision.HIGHEST) + b_out


if __name__ == "__main__":
    B, input_dim, hidden_dim, output_dim = 16, 2, 32, 16
    frequencies = (5.0, 10.0, 30.0, 60.0)   # module defaults
    num_layers = 3                          # module default

    key = jax.random.PRNGKey(0)
    kx, kp = jax.random.split(key)
    x = jax.random.uniform(kx, (B, input_dim), jnp.float32, -1.0, 1.0)  # SIREN coords
    params = init_params(kp, input_dim, hidden_dim, output_dim, frequencies, num_layers)

    expanded = expand_params(params, frequencies)   # one-time prep, hoisted out of forward
    out = multifreq_siren_forward(x, expanded)
    out = jax.block_until_ready(out)

    ref = _reference_forward(x, params, frequencies)
    assert out.shape == (B, output_dim), out.shape
    # sin(60 * Linear(sin(60 * Linear(x)))) amplifies per-op rounding; the 3-pass
    # bf16 matmul keeps error at ~1e-3, well inside the tolerance below.
    max_err = float(jnp.max(jnp.abs(out - ref)))
    assert jnp.allclose(out, ref, atol=1e-2, rtol=1e-2), max_err

    print("KERNEL_OK")
</pallas_src>

<mosaic_0001>
module attributes {stable_mosaic.version = 11 : i64} {
  func.func @_mf_siren_kernel(%arg0: i32, %arg1: memref<8x2xf32, #tpu.memory_space<vmem>>, %arg2: memref<2x128xf32, #tpu.memory_space<vmem>>, %arg3: memref<1x128xf32, #tpu.memory_space<vmem>>, %arg4: memref<128x128xbf16, #tpu.memory_space<vmem>>, %arg5: memref<128x128xbf16, #tpu.memory_space<vmem>>, %arg6: memref<1x128xf32, #tpu.memory_space<vmem>>, %arg7: memref<128x16xbf16, #tpu.memory_space<vmem>>, %arg8: memref<128x16xbf16, #tpu.memory_space<vmem>>, %arg9: memref<1x16xf32, #tpu.memory_space<vmem>>, %arg10: memref<8x16xf32, #tpu.memory_space<vmem>>) attributes {dimension_semantics = [#tpu.dimension_semantics<parallel>], iteration_bounds = array<i64: 2>, scalar_prefetch = 0 : i64, scratch_operands = 0 : i64, tpu.core_type = #tpu.core_type<tc>, window_params = [{transform_indices = @transform_0, window_bounds = array<i64: 8, 2>}, {pipeline_mode = #tpu.pipeline_mode<synchronous>, transform_indices = @transform_1, window_bounds = array<i64: 2, 128>}, {pipeline_mode = #tpu.pipeline_mode<synchronous>, transform_indices = @transform_2, window_bounds = array<i64: 1, 128>}, {pipeline_mode = #tpu.pipeline_mode<synchronous>, transform_indices = @transform_3, window_bounds = array<i64: 128, 128>}, {pipeline_mode = #tpu.pipeline_mode<synchronous>, transform_indices = @transform_4, window_bounds = array<i64: 128, 128>}, {pipeline_mode = #tpu.pipeline_mode<synchronous>, transform_indices = @transform_5, window_bounds = array<i64: 1, 128>}, {pipeline_mode = #tpu.pipeline_mode<synchronous>, transform_indices = @transform_6, window_bounds = array<i64: 128, 16>}, {pipeline_mode = #tpu.pipeline_mode<synchronous>, transform_indices = @transform_7, window_bounds = array<i64: 128, 16>}, {pipeline_mode = #tpu.pipeline_mode<synchronous>, transform_indices = @transform_8, window_bounds = array<i64: 1, 16>}, {transform_indices = @transform_9, window_bounds = array<i64: 8, 16>}]} {
    %c0 = arith.constant 0 : index
    %c0_0 = arith.constant 0 : index
    %0 = vector.load %arg1[%c0, %c0_0] : memref<8x2xf32, #tpu.memory_space<vmem>>, vector<8x2xf32>
    %c0_1 = arith.constant 0 : index
    %c0_2 = arith.constant 0 : index
    %1 = vector.load %arg2[%c0_1, %c0_2] : memref<2x128xf32, #tpu.memory_space<vmem>>, vector<2x128xf32>
    %c0_3 = arith.constant 0 : index
    %c0_4 = arith.constant 0 : index
    %2 = vector.load %arg3[%c0_3, %c0_4] : memref<1x128xf32, #tpu.memory_space<vmem>>, vector<1x128xf32>
    %3 = vector.extract_strided_slice %0 {offsets = [0, 0], sizes = [8, 1], strides = [1, 1]} : vector<8x2xf32> to vector<8x1xf32>
    %4 = vector.extract_strided_slice %1 {offsets = [0, 0], sizes = [1, 128], strides = [1, 1]} : vector<2x128xf32> to vector<1x128xf32>
    %5 = vector.broadcast %3 : vector<8x1xf32> to vector<8x128xf32>
    %6 = vector.broadcast %4 : vector<1x128xf32> to vector<8x128xf32>
    %7 = arith.mulf %5, %6 : vector<8x128xf32>
    %8 = vector.broadcast %2 : vector<1x128xf32> to vector<8x128xf32>
    %9 = arith.addf %8, %7 : vector<8x128xf32>
    %10 = vector.extract_strided_slice %0 {offsets = [0, 1], sizes = [8, 1], strides = [1, 1]} : vector<8x2xf32> to vector<8x1xf32>
    %11 = vector.extract_strided_slice %1 {offsets = [1, 0], sizes = [1, 128], strides = [1, 1]} : vector<2x128xf32> to vector<1x128xf32>
    %12 = vector.broadcast %10 : vector<8x1xf32> to vector<8x128xf32>
    %13 = vector.broadcast %11 : vector<1x128xf32> to vector<8x128xf32>
    %14 = arith.mulf %12, %13 : vector<8x128xf32>
    %15 = arith.addf %9, %14 : vector<8x128xf32>
    %16 = math.sin %15 : vector<8x128xf32>
    %c0_5 = arith.constant 0 : index
    %c0_6 = arith.constant 0 : index
    %17 = vector.load %arg4[%c0_5, %c0_6] : memref<128x128xbf16, #tpu.memory_space<vmem>>, vector<128x128xbf16>
    %c0_7 = arith.constant 0 : index
    %c0_8 = arith.constant 0 : index
    %18 = vector.load %arg5[%c0_7, %c0_8] : memref<128x128xbf16, #tpu.memory_space<vmem>>, vector<128x128xbf16>
    %c0_9 = arith.constant 0 : index
    %c0_10 = arith.constant 0 : index
    %19 = vector.load %arg6[%c0_9, %c0_10] : memref<1x128xf32, #tpu.memory_space<vmem>>, vector<1x128xf32>
    %20 = arith.truncf %16 : vector<8x128xf32> to vector<8x128xbf16>
    %21 = arith.extf %20 : vector<8x128xbf16> to vector<8x128xf32>
    %22 = arith.subf %16, %21 : vector<8x128xf32>
    %23 = arith.truncf %22 : vector<8x128xf32> to vector<8x128xbf16>
    %cst = arith.constant dense<0.000000e+00> : vector<8x128xf32>
    %24 = tpu.matmul %20, %17, %cst {dimension_numbers = #tpu.dot_dimension_numbers<[1], [0], [0], [1], [0, 0, 1, 1], [], []>} : vector<8x128xbf16>, vector<128x128xbf16>, vector<8x128xf32> -> vector<8x128xf32>
    %cst_11 = arith.constant dense<0.000000e+00> : vector<8x128xf32>
    %25 = tpu.matmul %23, %17, %cst_11 {dimension_numbers = #tpu.dot_dimension_numbers<[1], [0], [0], [1], [0, 0, 1, 1], [], []>} : vector<8x128xbf16>, vector<128x128xbf16>, vector<8x128xf32> -> vector<8x128xf32>
    %26 = arith.addf %24, %25 : vector<8x128xf32>
    %cst_12 = arith.constant dense<0.000000e+00> : vector<8x128xf32>
    %27 = tpu.matmul %20, %18, %cst_12 {dimension_numbers = #tpu.dot_dimension_numbers<[1], [0], [0], [1], [0, 0, 1, 1], [], []>} : vector<8x128xbf16>, vector<128x128xbf16>, vector<8x128xf32> -> vector<8x128xf32>
    %28 = arith.addf %26, %27 : vector<8x128xf32>
    %29 = vector.broadcast %19 : vector<1x128xf32> to vector<8x128xf32>
    %30 = arith.addf %28, %29 : vector<8x128xf32>
    %31 = math.sin %30 : vector<8x128xf32>
    %c0_13 = arith.constant 0 : index
    %c0_14 = arith.constant 0 : index
    %32 = vector.load %arg7[%c0_13, %c0_14] : memref<128x16xbf16, #tpu.memory_space<vmem>>, vector<128x16xbf16>
    %c0_15 = arith.constant 0 : index
    %c0_16 = arith.constant 0 : index
    %33 = vector.load %arg8[%c0_15, %c0_16] : memref<128x16xbf16, #tpu.memory_space<vmem>>, vector<128x16xbf16>
    %c0_17 = arith.constant 0 : index
    %c0_18 = arith.constant 0 : index
    %34 = vector.load %arg9[%c0_17, %c0_18] : memref<1x16xf32, #tpu.memory_space<vmem>>, vector<1x16xf32>
    %35 = arith.truncf %31 : vector<8x128xf32> to vector<8x128xbf16>
    %36 = arith.extf %35 : vector<8x128xbf16> to vector<8x128xf32>
    %37 = arith.subf %31, %36 : vector<8x128xf32>
    %38 = arith.truncf %37 : vector<8x128xf32> to vector<8x128xbf16>
    %cst_19 = arith.constant dense<0.000000e+00> : vector<8x16xf32>
    %39 = tpu.matmul %35, %32, %cst_19 {dimension_numbers = #tpu.dot_dimension_numbers<[1], [0], [0], [1], [0, 0, 1, 1], [], []>} : vector<8x128xbf16>, vector<128x16xbf16>, vector<8x16xf32> -> vector<8x16xf32>
    %cst_20 = arith.constant dense<0.000000e+00> : vector<8x16xf32>
    %40 = tpu.matmul %38, %32, %cst_20 {dimension_numbers = #tpu.dot_dimension_numbers<[1], [0], [0], [1], [0, 0, 1, 1], [], []>} : vector<8x128xbf16>, vector<128x16xbf16>, vector<8x16xf32> -> vector<8x16xf32>
    %41 = arith.addf %39, %40 : vector<8x16xf32>
    %cst_21 = arith.constant dense<0.000000e+00> : vector<8x16xf32>
    %42 = tpu.matmul %35, %33, %cst_21 {dimension_numbers = #tpu.dot_dimension_numbers<[1], [0], [0], [1], [0, 0, 1, 1], [], []>} : vector<8x128xbf16>, vector<128x16xbf16>, vector<8x16xf32> -> vector<8x16xf32>
    %43 = arith.addf %41, %42 : vector<8x16xf32>
    %44 = vector.broadcast %34 : vector<1x16xf32> to vector<8x16xf32>
    %45 = arith.addf %43, %44 : vector<8x16xf32>
    %c0_22 = arith.constant 0 : index
    %c0_23 = arith.constant 0 : index
    %46 = vector.load %arg10[%c0_22, %c0_23] : memref<8x16xf32, #tpu.memory_space<vmem>>, vector<8x16xf32>
    tpu.vector_store %arg10[%c0_22, %c0_23], %45 {strides = array<i32>} : memref<8x16xf32, #tpu.memory_space<vmem>>, vector<8x16xf32>,
    return
  }
  func.func @transform_0(%arg0: i32) -> (i32, i32) {
    %c0_i32 = arith.constant 0 : i32
    %c0_i32_0 = arith.constant 0 : i32
    return %arg0, %c0_i32 : i32, i32
  }
  func.func @transform_1(%arg0: i32) -> (i32, i32) {
    %c0_i32 = arith.constant 0 : i32
    %c0_i32_0 = arith.constant 0 : i32
    %c0_i32_1 = arith.constant 0 : i32
    return %c0_i32, %c0_i32_0 : i32, i32
  }
  func.func @transform_2(%arg0: i32) -> (i32, i32) {
    %c0_i32 = arith.constant 0 : i32
    %c0_i32_0 = arith.constant 0 : i32
    %c0_i32_1 = arith.constant 0 : i32
    return %c0_i32, %c0_i32_0 : i32, i32
  }
  func.func @transform_3(%arg0: i32) -> (i32, i32) {
    %c0_i32 = arith.constant 0 : i32
    %c0_i32_0 = arith.constant 0 : i32
    %c0_i32_1 = arith.constant 0 : i32
    return %c0_i32, %c0_i32_0 : i32, i32
  }
  func.func @transform_4(%arg0: i32) -> (i32, i32) {
    %c0_i32 = arith.constant 0 : i32
    %c0_i32_0 = arith.constant 0 : i32
    %c0_i32_1 = arith.constant 0 : i32
    return %c0_i32, %c0_i32_0 : i32, i32
  }
  func.func @transform_5(%arg0: i32) -> (i32, i32) {
    %c0_i32 = arith.constant 0 : i32
    %c0_i32_0 = arith.constant 0 : i32
    %c0_i32_1 = arith.constant 0 : i32
    return %c0_i32, %c0_i32_0 : i32, i32
  }
  func.func @transform_6(%arg0: i32) -> (i32, i32) {
    %c0_i32 = arith.constant 0 : i32
    %c0_i32_0 = arith.constant 0 : i32
    %c0_i32_1 = arith.constant 0 : i32
    return %c0_i32, %c0_i32_0 : i32, i32
  }
  func.func @transform_7(%arg0: i32) -> (i32, i32) {
    %c0_i32 = arith.constant 0 : i32
    %c0_i32_0 = arith.constant 0 : i32
    %c0_i32_1 = arith.constant 0 : i32
    return %c0_i32, %c0_i32_0 : i32, i32
  }
  func.func @transform_8(%arg0: i32) -> (i32, i32) {
    %c0_i32 = arith.constant 0 : i32
    %c0_i32_0 = arith.constant 0 : i32
    %c0_i32_1 = arith.constant 0 : i32
    return %c0_i32, %c0_i32_0 : i32, i32
  }
  func.func @transform_9(%arg0: i32) -> (i32, i32) {
    %c0_i32 = arith.constant 0 : i32
    %c0_i32_0 = arith.constant 0 : i32
    return %arg0, %c0_i32 : i32, i32
  }
}

</mosaic_0001>

<llo_original>
// kernel: tpu_custom_call.1
$region0: #{tpu_custom_call.1}
  #allocation0 [shape = 'u32[]', space=smem, size = 0x4, offset = 0x4, fixed_abs, tag = 'smem constant byte address 0x4 - core index']
  #allocation1 [shape = 'u32[144,128]{1,0:T(1,128)}', space=vmem, size = 0x12000, scoped, tag = 'internal scratch']
  %s0 = inlined_call_operand.vmem [shape: f32[16,2], index: 0, kind: input, shape index: {}]
  %s1 = inlined_call_operand.vmem [shape: f32[2,128], index: 1, kind: input, shape index: {}]
  %s2 = inlined_call_operand.vmem [shape: f32[1,128], index: 2, kind: input, shape index: {}]
  %s3 = inlined_call_operand.vmem [shape: bf16[128,128], index: 3, kind: input, shape index: {}]
  %s4 = inlined_call_operand.vmem [shape: bf16[128,128], index: 4, kind: input, shape index: {}]
  %s5 = inlined_call_operand.vmem [shape: f32[1,128], index: 5, kind: input, shape index: {}]
  %s6 = inlined_call_operand.vmem [shape: bf16[128,16], index: 6, kind: input, shape index: {}]
  %s7 = inlined_call_operand.vmem [shape: bf16[128,16], index: 7, kind: input, shape index: {}]
  %s8 = inlined_call_operand.vmem [shape: f32[1,16], index: 8, kind: input, shape index: {}]
  %s9 = inlined_call_operand.hbm [shape: f32[16,16], index: 9, kind: output, shape index: {}]
  %s10 = sld [smem:[#allocation0]]
  $region69: #{tpu_custom_call.1} parent=0
    _
  %s12 = ssub.s32 1, %s10
  %s13 = scalar_select 0, %s12, %s10
  $region1: #{tpu_custom_call.1} parent=0
    #allocation2 [shape = 'u8[8192]{0}', space=vmem, size = 0x2000, scoped, tag = 'output window, operand 0']
    #allocation3 [shape = 's32[2]{0}', space=sflag, size = 0x8, scoped, tag = 'scoped memory for tpu_custom_call.1']
    %14 = vsyncpa [#allocation3], 0
    %s15 = scalar_lea.sflag [#allocation3], 1
    %16 = vsyncpa %s15, 0
    loop: start=0, step=1, limit=4
    $region2: #{tpu_custom_call.1} parent=1 // loop_pre_header
      _
    $region3: #{tpu_custom_call.1} parent=1 // loop_header
      %s18 = sphi 0, %s22
      %p19 = scmp.ge.s32.totalorder %s18, 4
      %s28 = sphi 0, %s30
      %s31 = sphi 0, %s28
      %s32 = sphi 0, %s31
      %s48 = sphi 0, %s32
      %s52 = sphi 0, %s52
      %s54 = sphi 0, %s52
      %s55 = sphi 0, %s54
      %s69 = sphi 0, %s55
      %s73 = sphi 0, %s73
      %s75 = sphi 0, %s73
      %s76 = sphi 0, %s75
      %s90 = sphi 0, %s76
      %s94 = sphi 0, %s94
      %s96 = sphi 0, %s94
      %s97 = sphi 0, %s96
      %s111 = sphi 0, %s97
      %s115 = sphi 0, %s115
      %s117 = sphi 0, %s115
      %s118 = sphi 0, %s117
      %s132 = sphi 0, %s118
      %s136 = sphi 0, %s136
      %s138 = sphi 0, %s136
      %s139 = sphi 0, %s138
      %s153 = sphi 0, %s139
      %s157 = sphi 0, %s157
      %s159 = sphi 0, %s157
      %s160 = sphi 0, %s159
      %s174 = sphi 0, %s160
      %s178 = sphi 0, %s178
      %s180 = sphi 0, %s178
      %s181 = sphi 0, %s180
      %s195 = sphi 0, %s181
      %s199 = sphi 0, %s199
      %s201 = sphi 0, %s199
      %s202 = sphi 0, %s201
      %s216 = sphi 0, %s202
      %s222 = sphi 0, %s224
      %s225 = sphi 0, %s222
      %s226 = sphi 0, %s225
      %s242 = sphi 0, %s226
    $region4: #{tpu_custom_call.1} parent=1 // loop_header_branch
      %21 = sbr.rel (%p19) target = $region8
    $region5: #{tpu_custom_call.1} parent=1 // loop_body
      %s23 = ssub.s32 %s18, 1
      %s24 = ssub.s32 %s18, 2
      %s25 = sadd.s32 %s18, 1
      %s26 = ssub.s32 %s18, %s25
      %p27 = scmp.eq.s32.totalorder %s26, 0
      %s29 = sadd.s32 %s28, 1
      %s30 = scalar_select %p27, %s28, %s29
      %p33 = pneg %p27
      %p34 = scmp.eq.s32.totalorder %s18, 1
      %p35 = por %p33, %p34
      %p36 = scmp.ne.s32.totalorder %s28, %s31
      %p37 = scmp.eq.s32.totalorder %s18, 0
      %p38 = por %p36, %p37
      %p39 = scmp.ne.s32.totalorder %s28, %s31
      %p40 = scmp.eq.s32.totalorder %s23, 1
      %p41 = por %p39, %p40
      %p42 = scmp.ne.s32.totalorder %s31, %s32
      %p43 = scmp.eq.s32.totalorder %s23, 0
      %p44 = por %p42, %p43
      %p45 = scmp.ne.s32.totalorder %s31, %s32
      %p46 = scmp.eq.s32.totalorder %s24, 1
      %p47 = por %p45, %p46
      %p49 = scmp.ne.s32.totalorder %s32, %s48
      %p50 = scmp.eq.s32.totalorder %s24, 0
      %p51 = por %p49, %p50
      %s53 = sadd.s32 %s52, 1
      %p56 = scmp.eq.s32.totalorder %s18, 1
      %p57 = scmp.ne.s32.totalorder %s52, %s54
      %p58 = scmp.eq.s32.totalorder %s18, 0
      %p59 = por %p57, %p58
      %p60 = scmp.ne.s32.totalorder %s52, %s54
      %p61 = scmp.eq.s32.totalorder %s23, 1
      %p62 = por %p60, %p61
      %p63 = scmp.ne.s32.totalorder %s54, %s55
      %p64 = scmp.eq.s32.totalorder %s23, 0
      %p65 = por %p63, %p64
      %p66 = scmp.ne.s32.totalorder %s54, %s55
      %p67 = scmp.eq.s32.totalorder %s24, 1
      %p68 = por %p66, %p67
      %p70 = scmp.ne.s32.totalorder %s55, %s69
      %p71 = scmp.eq.s32.totalorder %s24, 0
      %p72 = por %p70, %p71
      %s74 = sadd.s32 %s73, 1
      %p77 = scmp.eq.s32.totalorder %s18, 1
      %p78 = scmp.ne.s32.totalorder %s73, %s75
      %p79 = scmp.eq.s32.totalorder %s18, 0
      %p80 = por %p78, %p79
      %p81 = scmp.ne.s32.totalorder %s73, %s75
      %p82 = scmp.eq.s32.totalorder %s23, 1
      %p83 = por %p81, %p82
      %p84 = scmp.ne.s32.totalorder %s75, %s76
      %p85 = scmp.eq.s32.totalorder %s23, 0
      %p86 = por %p84, %p85
      %p87 = scmp.ne.s32.totalorder %s75, %s76
      %p88 = scmp.eq.s32.totalorder %s24, 1
      %p89 = por %p87, %p88
      %p91 = scmp.ne.s32.totalorder %s76, %s90
      %p92 = scmp.eq.s32.totalorder %s24, 0
      %p93 = por %p91, %p92
      %s95 = sadd.s32 %s94, 1
      %p98 = scmp.eq.s32.totalorder %s18, 1
      %p99 = scmp.ne.s32.totalorder %s94, %s96
      %p100 = scmp.eq.s32.totalorder %s18, 0
      %p101 = por %p99, %p100
      %p102 = scmp.ne.s32.totalorder %s94, %s96
      %p103 = scmp.eq.s32.totalorder %s23, 1
      %p104 = por %p102, %p103
      %p105 = scmp.ne.s32.totalorder %s96, %s97
      %p106 = scmp.eq.s32.totalorder %s23, 0
      %p107 = por %p105, %p106
      %p108 = scmp.ne.s32.totalorder %s96, %s97
      %p109 = scmp.eq.s32.totalorder %s24, 1
      %p110 = por %p108, %p109
      %p112 = scmp.ne.s32.totalorder %s97, %s111
      %p113 = scmp.eq.s32.totalorder %s24, 0
      %p114 = por %p112, %p113
      %s116 = sadd.s32 %s115, 1
      %p119 = scmp.eq.s32.totalorder %s18, 1
      %p120 = scmp.ne.s32.totalorder %s115, %s117
      %p121 = scmp.eq.s32.totalorder %s18, 0
      %p122 = por %p120, %p121
      %p123 = scmp.ne.s32.totalorder %s115, %s117
      %p124 = scmp.eq.s32.totalorder %s23, 1
      %p125 = por %p123, %p124
      %p126 = scmp.ne.s32.totalorder %s117, %s118
      %p127 = scmp.eq.s32.totalorder %s23, 0
      %p128 = por %p126, %p127
      %p129 = scmp.ne.s32.totalorder %s117, %s118
      %p130 = scmp.eq.s32.totalorder %s24, 1
      %p131 = por %p129, %p130
      %p133 = scmp.ne.s32.totalorder %s118, %s132
      %p134 = scmp.eq.s32.totalorder %s24, 0
      %p135 = por %p133, %p134
      %s137 = sadd.s32 %s136, 1
      %p140 = scmp.eq.s32.totalorder %s18, 1
      %p141 = scmp.ne.s32.totalorder %s136, %s138
      %p142 = scmp.eq.s32.totalorder %s18, 0
      %p143 = por %p141, %p142
      %p144 = scmp.ne.s32.totalorder %s136, %s138
      %p145 = scmp.eq.s32.totalorder %s23, 1
      %p146 = por %p144, %p145
      %p147 = scmp.ne.s32.totalorder %s138, %s139
      %p148 = scmp.eq.s32.totalorder %s23, 0
      %p149 = por %p147, %p148
      %p150 = scmp.ne.s32.totalorder %s138, %s139
      %p151 = scmp.eq.s32.totalorder %s24, 1
      %p152 = por %p150, %p151
      %p154 = scmp.ne.s32.totalorder %s139, %s153
      %p155 = scmp.eq.s32.totalorder %s24, 0
      %p156 = por %p154, %p155
      %s158 = sadd.s32 %s157, 1
      %p161 = scmp.eq.s32.totalorder %s18, 1
      %p162 = scmp.ne.s32.totalorder %s157, %s159
      %p163 = scmp.eq.s32.totalorder %s18, 0
      %p164 = por %p162, %p163
      %p165 = scmp.ne.s32.totalorder %s157, %s159
      %p166 = scmp.eq.s32.totalorder %s23, 1
      %p167 = por %p165, %p166
      %p168 = scmp.ne.s32.totalorder %s159, %s160
      %p169 = scmp.eq.s32.totalorder %s23, 0
      %p170 = por %p168, %p169
      %p171 = scmp.ne.s32.totalorder %s159, %s160
      %p172 = scmp.eq.s32.totalorder %s24, 1
      %p173 = por %p171, %p172
      %p175 = scmp.ne.s32.totalorder %s160, %s174
      %p176 = scmp.eq.s32.totalorder %s24, 0
      %p177 = por %p175, %p176
      %s179 = sadd.s32 %s178, 1
      %p182 = scmp.eq.s32.totalorder %s18, 1
      %p183 = scmp.ne.s32.totalorder %s178, %s180
      %p184 = scmp.eq.s32.totalorder %s18, 0
      %p185 = por %p183, %p184
      %p186 = scmp.ne.s32.totalorder %s178, %s180
      %p187 = scmp.eq.s32.totalorder %s23, 1
      %p188 = por %p186, %p187
      %p189 = scmp.ne.s32.totalorder %s180, %s181
      %p190 = scmp.eq.s32.totalorder %s23, 0
      %p191 = por %p189, %p190
      %p192 = scmp.ne.s32.totalorder %s180, %s181
      %p193 = scmp.eq.s32.totalorder %s24, 1
      %p194 = por %p192, %p193
      %p196 = scmp.ne.s32.totalorder %s181, %s195
      %p197 = scmp.eq.s32.totalorder %s24, 0
      %p198 = por %p196, %p197
      %s200 = sadd.s32 %s199, 1
      %p203 = scmp.eq.s32.totalorder %s18, 1
      %p204 = scmp.ne.s32.totalorder %s199, %s201
      %p205 = scmp.eq.s32.totalorder %s18, 0
      %p206 = por %p204, %p205
      %p207 = scmp.ne.s32.totalorder %s199, %s201
      %p208 = scmp.eq.s32.totalorder %s23, 1
      %p209 = por %p207, %p208
      %p210 = scmp.ne.s32.totalorder %s201, %s202
      %p211 = scmp.eq.s32.totalorder %s23, 0
      %p212 = por %p210, %p211
      %p213 = scmp.ne.s32.totalorder %s201, %s202
      %p214 = scmp.eq.s32.totalorder %s24, 1
      %p215 = por %p213, %p214
      %p217 = scmp.ne.s32.totalorder %s202, %s216
      %p218 = scmp.eq.s32.totalorder %s24, 0
      %p219 = por %p217, %p218
      %s220 = ssub.s32 %s18, %s25
      %p221 = scmp.eq.s32.totalorder %s220, 0
      %s223 = sadd.s32 %s222, 1
      %s224 = scalar_select %p221, %s222, %s223
      %p227 = pneg %p221
      %p228 = scmp.eq.s32.totalorder %s18, 1
      %p229 = por %p227, %p228
      %p230 = scmp.ne.s32.totalorder %s222, %s225
      %p231 = scmp.eq.s32.totalorder %s18, 0
      %p232 = por %p230, %p231
      %p233 = scmp.ne.s32.totalorder %s222, %s225
      %p234 = scmp.eq.s32.totalorder %s23, 1
      %p235 = por %p233, %p234
      %p236 = scmp.ne.s32.totalorder %s225, %s226
      %p237 = scmp.eq.s32.totalorder %s23, 0
      %p238 = por %p236, %p237
      %p239 = scmp.ne.s32.totalorder %s225, %s226
      %p240 = scmp.eq.s32.totalorder %s24, 1
      %p241 = por %p239, %p240
      %p243 = scmp.ne.s32.totalorder %s226, %s242
      %p244 = scmp.eq.s32.totalorder %s24, 0
      %p245 = por %p243, %p244
      %p246 = scmp.le.s32.totalorder 1, %s18
      %p247 = scmp.lt.s32.totalorder %s18, 3
      %p248 = pnand %p246, %p247
      %p249 = pneg %p248
      // Predicated region
      $region9: #{tpu_custom_call.1} parent=5 // pred_check
        _
      $region10: #{tpu_custom_call.1} parent=5 // pred_check_branch
        %251 = sbr.rel (%p248) target = $region12
      $region11: #{tpu_custom_call.1} parent=5 // pred_region
        %s252 = ssub.s32 %s18, 1
        // Predicated region
        $region13: #{tpu_custom_call.1} parent=11 // pred_check
          %p253 = pneg %p65
        $region14: #{tpu_custom_call.1} parent=11 // pred_check_branch
          %255 = sbr.rel (%p253) target = $region16
        $region15: #{tpu_custom_call.1} parent=11 // pred_region
          _
        $region16: #{tpu_custom_call.1} parent=11 // pred_fallthru
          _
        // Predicated region
        $region17: #{tpu_custom_call.1} parent=11 // pred_check
          %p256 = pneg %p86
        $region18: #{tpu_custom_call.1} parent=11 // pred_check_branch
          %258 = sbr.rel (%p256) target = $region20
        $region19: #{tpu_custom_call.1} parent=11 // pred_region
          _
        $region20: #{tpu_custom_call.1} parent=11 // pred_fallthru
          _
        // Predicated region
        $region21: #{tpu_custom_call.1} parent=11 // pred_check
          %p259 = pneg %p107
        $region22: #{tpu_custom_call.1} parent=11 // pred_check_branch
          %261 = sbr.rel (%p259) target = $region24
        $region23: #{tpu_custom_call.1} parent=11 // pred_region
          _
        $region24: #{tpu_custom_call.1} parent=11 // pred_fallthru
          _
        // Predicated region
        $region25: #{tpu_custom_call.1} parent=11 // pred_check
          %p262 = pneg %p128
        $region26: #{tpu_custom_call.1} parent=11 // pred_check_branch
          %264 = sbr.rel (%p262) target = $region28
        $region27: #{tpu_custom_call.1} parent=11 // pred_region
          _
        $region28: #{tpu_custom_call.1} parent=11 // pred_fallthru
          _
        // Predicated region
        $region29: #{tpu_custom_call.1} parent=11 // pred_check
          %p265 = pneg %p149
        $region30: #{tpu_custom_call.1} parent=11 // pred_check_branch
          %267 = sbr.rel (%p265) target = $region32
        $region31: #{tpu_custom_call.1} parent=11 // pred_region
          _
        $region32: #{tpu_custom_call.1} parent=11 // pred_fallthru
          _
        // Predicated region
        $region33: #{tpu_custom_call.1} parent=11 // pred_check
          %p268 = pneg %p170
        $region34: #{tpu_custom_call.1} parent=11 // pred_check_branch
          %270 = sbr.rel (%p268) target = $region36
        $region35: #{tpu_custom_call.1} parent=11 // pred_region
          _
        $region36: #{tpu_custom_call.1} parent=11 // pred_fallthru
          _
        // Predicated region
        $region37: #{tpu_custom_call.1} parent=11 // pred_check
          %p271 = pneg %p191
        $region38: #{tpu_custom_call.1} parent=11 // pred_check_branch
          %273 = sbr.rel (%p271) target = $region40
        $region39: #{tpu_custom_call.1} parent=11 // pred_region
          _
        $region40: #{tpu_custom_call.1} parent=11 // pred_fallthru
          _
        // Predicated region
        $region41: #{tpu_custom_call.1} parent=11 // pred_check
          %p274 = pneg %p212
        $region42: #{tpu_custom_call.1} parent=11 // pred_check_branch
          %276 = sbr.rel (%p274) target = $region44
        $region43: #{tpu_custom_call.1} parent=11 // pred_region
          _
        $region44: #{tpu_custom_call.1} parent=11 // pred_fallthru
          _
      $region12: #{tpu_custom_call.1} parent=5 // pred_fallthru
        _
      %p277 = scmp.lt.s32.totalorder %s18, 2
      // Predicated region
      $region45: #{tpu_custom_call.1} parent=5 // pred_check
        %p278 = pneg %p277
      $region46: #{tpu_custom_call.1} parent=5 // pred_check_branch
        %280 = sbr.rel (%p278) target = $region48
      $region47: #{tpu_custom_call.1} parent=5 // pred_region
        // Predicated region
        $region49: #{tpu_custom_call.1} parent=47 // pred_check
          %p281 = pneg %p38
        $region50: #{tpu_custom_call.1} parent=47 // pred_check_branch
          %283 = sbr.rel (%p281) target = $region52
        $region51: #{tpu_custom_call.1} parent=47 // pred_region
          %p284 = scmp.lt.s32.totalorder %s18, 1
          %s285 = scalar_select %p284, %s18, 1
          %s286 = smul.addr %s285, 8
          %s287 = scalar_lea.vmem %s0, %s286
        $region52: #{tpu_custom_call.1} parent=47 // pred_fallthru
          _
      $region48: #{tpu_custom_call.1} parent=5 // pred_fallthru
        _
      %p288 = scmp.le.s32.totalorder 1, %s18
      %p289 = scmp.lt.s32.totalorder %s18, 3
      %p290 = pnand %p288, %p289
      %p291 = pneg %p290
      // Predicated region
      $region53: #{tpu_custom_call.1} parent=5 // pred_check
        _
      $region54: #{tpu_custom_call.1} parent=5 // pred_check_branch
        %293 = sbr.rel (%p290) target = $region56
      $region55: #{tpu_custom_call.1} parent=5 // pred_region
        %s294 = ssub.s32 %s18, 1
        %p295 = scmp.lt.s32.totalorder %s23, 1
        %s296 = scalar_select %p295, %s23, 1
        %s297 = smul.addr %s296, 8
        %s298 = scalar_lea.vmem %s0, %s297
        %p299 = pneg %p44
        %p300 = pneg %p41
        %p301 = pneg %p65
        %p302 = pneg %p62
        %p303 = pneg %p86
        %p304 = pneg %p83
        %p305 = pneg %p107
        %p306 = pneg %p104
        %p307 = pneg %p128
        %p308 = pneg %p125
        %p309 = pneg %p149
        %p310 = pneg %p146
        %p311 = pneg %p170
        %p312 = pneg %p167
        %p313 = pneg %p191
        %p314 = pneg %p188
        %p315 = pneg %p212
        %p316 = pneg %p209
        %p317 = pneg %p238
        %p318 = pneg %p235
        %s319 = sand.u32 %s225, 1
        %s320 = scalar_lea.sflag [#allocation3], %s319
        %s321 = sand.u32 %s225, 1
        %s322 = smul.addr %s321, 8
        %s323 = scalar_lea.vmem [#allocation2], %s322
        %p324 = scmp.lt.s32.totalorder %s23, 1
        %s325 = scalar_select %p324, %s23, 1
        %s326 = smul.addr %s325, 8
        %s327 = scalar_lea.vmem %s0, %s326
        %v329 = vld [vmem:[%s327] sm:$0xff]
        %v330 = vld [vmem:[%s1] sm:$0x3]
        %v331 = vld [vmem:[%s2] sm:$0x1]
        %333 = vset.pattern.permute.xlu0 0
        %334 = vperm.xlu0 %333, %v329
        %v335 = vpop.permute.xlu0 %334
        %v337 = vlaneseq
        %v338 = vshrl.u32 %v337, 7
        %v339 = vsub.s32 0, %v338
        %v340 = vrot.slane %v330, %v339
        %v341 = vmul.f32 %v335, %v340
        %v343 = vlaneseq
        %v344 = vshrl.u32 %v343, 7
        %v345 = vsub.s32 0, %v344
        %v346 = vrot.slane %v331, %v345
        %v348 = vadd.f32 %v346, %v341
        %349 = vset.pattern.permute.xlu0 1
        %350 = vperm.xlu0 %349, %v329
        %v351 = vpop.permute.xlu0 %350
        %v353 = vlaneseq
        %v354 = vshrl.u32 %v353, 7
        %v355 = vsub.s32 1, %v354
        %v356 = vrot.slane %v330, %v355
        %v357 = vmul.f32 %v351, %v356
        %v358 = vadd.f32 %v348, %v357
        %v359 = vand.u32 2147483647, %v358
        %vm360 = vcmp.le.f32.partialorder %v359, 0.7853982
        %vm361 = vcmp.lt.s32.totalorder %v358, 0
        %v362 = vand.u32 %v358, 2139095040
        %v363 = vshrl.u32 %v362, 23
        %v364 = vsub.s32 %v363, 127
        %v365 = vand.u32 2147483647, %v358
        %v366 = vand.u32 %v365, 8388607
        %v367 = vor.u32 %v366, 8388608
        %v368 = vsub.s32 0, %v367
        %v369 = vadd.s32 %v364, 1
        %vm370 = vcmp.gt.s32.totalorder %v369, 0
        %v371 = vsel %vm370, %v369, 0
        %v372 = vshrl.u32 %v371, 5
        %v373 = vand.u32 %v371, 31
        %v374 = vsub.s32 32, %v373
        %v375 = vshrl.u32 683565275, %v374
        %v376 = vshll.u32 683565275, %v373
        %v377 = vshrl.u32 2475754826, %v374
        %v378 = vor.u32 %v376, %v377
        %v379 = vshll.u32 2475754826, %v373
        %v380 = vshrl.u32 2131351028, %v374
        %v381 = vor.u32 %v379, %v380
        %v382 = vshll.u32 2131351028, %v373
        %v383 = vshrl.u32 2102212464, %v374
        %v384 = vor.u32 %v382, %v383
        %v385 = vshll.u32 2102212464, %v373
        %v386 = vshrl.u32 920167782, %v374
        %v387 = vor.u32 %v385, %v386
        %v388 = vshll.u32 920167782, %v373
        %v389 = vshrl.u32 1326507024, %v374
        %v390 = vor.u32 %v388, %v389
        %vm391 = vcmp.lt.s32.totalorder %v372, 1
        %vm392 = vcmp.lt.s32.totalorder %v372, 2
        %vm393 = vcmp.lt.s32.totalorder %v372, 3
        %vm394 = vcmp.lt.s32.totalorder %v372, 4
        %v395 = vsel %vm391, %v375, %v378
        %v396 = vsel %vm394, %v384, 2102212464
        %v397 = vsel %vm393, %v381, %v396
        %v398 = vsel %vm392, %v395, %v397
        %v399 = vsel %vm391, %v378, %v381
        %v400 = vsel %vm394, %v387, 920167782
        %v401 = vsel %vm393, %v384, %v400
        %v402 = vsel %vm392, %v399, %v401
        %v403 = vsel %vm391, %v381, %v384
        %v404 = vsel %vm394, %v390, 1326507024
        %v405 = vsel %vm393, %v387, %v404
        %v406 = vsel %vm392, %v403, %v405
        %v407 = vshll.u32 %v367, 8
        %v408 = vmul.u32.u64.compose %v407, %v406
        %v409 = vextract.low.u32 %v408
        %v410 = vextract.high.u32 %v408
        %v411 = vmul.u32.u64.compose %v407, %v402
        %v412 = vextract.low.u32 %v411
        %v413 = vextract.high.u32 %v411
        %v414 = vmul.u32 %v407, %v398
        %v415 = vadd.s32 %v410, %v412
        %vm416 = vc.u32 %v410, %v412
        %v417 = vadd.s32 %v413, 1
        %v418 = vsel %vm416, %v417, %v413
        %v419 = vadd.s32 %v414, %v418
        %v420 = vadd.s32 %v419, 536870912
        %v421 = vshrl.u32 %v420, 30
        %v422 = vshll.u32 %v421, 30
        %v423 = vsub.s32 %v419, %v422
        %vm424 = vcmp.lt.s32.totalorder %v423, 0
        %v425 = vsub.s32 0, %v423
        %v426 = vsel %vm424, %v425, %v423
        %v427 = vclz %v426
        %v428 = vsub.s32 %v427, 2
        %vm429 = vcmp.gt.s32.totalorder 0, %v428
        %v430 = vsel %vm429, 0, %v428
        %v431 = vsub.s32 32, %v430
        %v432 = vshll.u32 %v423, %v430
        %v433 = vshrl.u32 %v415, %v431
        %v434 = vor.u32 %v432, %v433
        %v435 = vsub.s32 4294967266, %v430
        %v436 = vadd.s32 %v435, 127
        %v437 = vshll.u32 %v436, 23
        %v438 = vor.u32 4788187, %v437
        %v439 = vand.u32 2147483647, %v438
        %v441 = vcvt.s32.f32 %v434
        %v442 = vmul.f32 %v441, %v439
        %v443 = vxor.u32 %v442, 2147483648
        %v444 = vsel %vm361, %v443, %v442
        %v445 = vsub.s32 4, %v421
        %v446 = vsel %vm361, %v445, %v421
        %v447 = vsel %vm360, %v358, %v444
        %v448 = vsel %vm360, 0, %v446
        %v449 = vcosq.f32.pop %v447
        %v450 = vsinq.f32.pop %v447
        %vm451 = vweird.f32 %v358
        %v452 = vadd.s32 %v448, 3
        %v453 = vand.u32 %v452, 3
        %vm454 = vcmp.lt.s32.totalorder %v453, 2
        %vm455 = vcmp.eq.s32.totalorder %v453, 0
        %v456 = vxor.u32 %v450, 2147483648
        %v457 = vsel %vm455, %v449, %v456
        %vm458 = vcmp.eq.s32.totalorder %v453, 2
        %v459 = vxor.u32 %v449, 2147483648
        %v460 = vsel %vm458, %v459, %v450
        %v461 = vsel %vm454, %v457, %v460
        %v462 = vsel %vm451, nan, %v461
        %v463 = vld [vmem:[%s3] sm:$0xf]
        %v464 = vld [vmem:[%s3 + $0x4] sm:$0xf]
        %v465 = vld [vmem:[%s3 + $0x8] sm:$0xf]
        %v466 = vld [vmem:[%s3 + $0xc] sm:$0xf]
        %v467 = vld [vmem:[%s3 + $0x10] sm:$0xf]
        %v468 = vld [vmem:[%s3 + $0x14] sm:$0xf]
        %v469 = vld [vmem:[%s3 + $0x18] sm:$0xf]
        %v470 = vld [vmem:[%s3 + $0x1c] sm:$0xf]
        %v471 = vld [vmem:[%s3 + $0x20] sm:$0xf]
        %v472 = vld [vmem:[%s3 + $0x24] sm:$0xf]
        %v473 = vld [vmem:[%s3 + $0x28] sm:$0xf]
        %v474 = vld [vmem:[%s3 + $0x2c] sm:$0xf]
        %v475 = vld [vmem:[%s3 + $0x30] sm:$0xf]
        %v476 = vld [vmem:[%s3 + $0x34] sm:$0xf]
        %v477 = vld [vmem:[%s3 + $0x38] sm:$0xf]
        %v478 = vld [vmem:[%s3 + $0x3c] sm:$0xf]
        %v479 = vld [vmem:[%s4] sm:$0xf]
        %v480 = vld [vmem:[%s4 + $0x4] sm:$0xf]
        %v481 = vld [vmem:[%s4 + $0x8] sm:$0xf]
        %v482 = vld [vmem:[%s4 + $0xc] sm:$0xf]
        %v483 = vld [vmem:[%s4 + $0x10] sm:$0xf]
        %v484 = vld [vmem:[%s4 + $0x14] sm:$0xf]
        %v485 = vld [vmem:[%s4 + $0x18] sm:$0xf]
        %v486 = vld [vmem:[%s4 + $0x1c] sm:$0xf]
        %v487 = vld [vmem:[%s4 + $0x20] sm:$0xf]
        %v488 = vld [vmem:[%s4 + $0x24] sm:$0xf]
        %v489 = vld [vmem:[%s4 + $0x28] sm:$0xf]
        %v490 = vld [vmem:[%s4 + $0x2c] sm:$0xf]
        %v491 = vld [vmem:[%s4 + $0x30] sm:$0xf]
        %v492 = vld [vmem:[%s4 + $0x34] sm:$0xf]
        %v493 = vld [vmem:[%s4 + $0x38] sm:$0xf]
        %v494 = vld [vmem:[%s4 + $0x3c] sm:$0xf]
        %v495 = vld [vmem:[%s5] sm:$0x1]
        %v496 = vpack.c.bf16 %v462, %v462
        %v497 = vunpack.c.l.bf16 %v496
        %v498 = vsub.f32 %v462, %v497
        %v499 = vpack.c.bf16 %v498, %v498
        %v516 = vunpack.c.l.b16 %v463
        %v517 = vunpack.c.l.b16 %v464
        %v518 = vunpack.c.l.b16 %v465
        %v519 = vunpack.c.l.b16 %v466
        %v520 = vunpack.c.l.b16 %v467
        %v521 = vunpack.c.l.b16 %v468
        %v522 = vunpack.c.l.b16 %v469
        %v523 = vunpack.c.l.b16 %v470
        %v524 = vunpack.c.l.b16 %v471
        %v525 = vunpack.c.l.b16 %v472
        %v526 = vunpack.c.l.b16 %v473
        %v527 = vunpack.c.l.b16 %v474
        %v528 = vunpack.c.l.b16 %v475
        %v529 = vunpack.c.l.b16 %v476
        %v530 = vunpack.c.l.b16 %v477
        %v531 = vunpack.c.l.b16 %v478
        %v532 = vpack.c.b16 %v517, %v516
        %v533 = vpack.c.b16 %v519, %v518
        %v534 = vpack.c.b16 %v521, %v520
        %v535 = vpack.c.b16 %v523, %v522
        %v536 = vpack.c.b16 %v525, %v524
        %v537 = vpack.c.b16 %v527, %v526
        %v538 = vpack.c.b16 %v529, %v528
        %v539 = vpack.c.b16 %v531, %v530
        %548 = vmatprep.subr.bf16.mxu0 0
        %549 = vmatpush1.bf16.msra.mxu0 %v539
        %550 = vmatprep.subr.bf16.mxu0 0
        %551 = vmatpush1.bf16.msra.mxu0 %v538
        %552 = vmatprep.subr.bf16.mxu0 0
        %553 = vmatpush1.bf16.msra.mxu0 %v537
        %554 = vmatprep.subr.bf16.mxu0 0
        %555 = vmatpush1.bf16.msra.mxu0 %v536
        %556 = vmatprep.subr.bf16.mxu0 0
        %557 = vmatpush1.bf16.msra.mxu0 %v535
        %558 = vmatprep.subr.bf16.mxu0 0
        %559 = vmatpush1.bf16.msra.mxu0 %v534
        %560 = vmatprep.subr.bf16.mxu0 0
        %561 = vmatpush1.bf16.msra.mxu0 %v533
        %562 = vmatprep.subr.bf16.mxu0 0
        %563 = vmatpush1.bf16.msra.mxu0 %v532
        %564 = vmatprep.subr.bf16.mxu0 0
        %565 = vmatpush2.bf16.msra.mxu0 0
        %566 = vmatprep.subr.bf16.mxu0 0
        %567 = vmatpush2.bf16.msra.mxu0 0
        %568 = vmatprep.subr.bf16.mxu0 0
        %569 = vmatpush2.bf16.msra.mxu0 0
        %570 = vmatprep.subr.bf16.mxu0 0
        %571 = vmatpush2.bf16.msra.mxu0 0
        %572 = vmatprep.subr.bf16.mxu0 0
        %573 = vmatpush2.bf16.msra.mxu0 0
        %574 = vmatprep.subr.bf16.mxu0 0
        %575 = vmatpush2.bf16.msra.mxu0 0
        %576 = vmatprep.subr.bf16.mxu0 0
        %577 = vmatpush2.bf16.msra.mxu0 0
        %578 = vmatprep.subr.bf16.mxu0 0
        %579 = vmatpush2.bf16.msra.mxu0 0
        %580 = vmatprep.mubr.bf16.mxu0 0
        %581 = vmatmul.mubr.bf16.gmra.mxu0 %v499
        %v582 = vpop.f32.mrf.mxu0
        %v583 = vadd.f32 0.0, %v582
        %v584 = vpop.f32.mrf.mxu0
        %v585 = vpop.f32.mrf.mxu0
        %v586 = vpop.f32.mrf.mxu0
        %587 = vdwg.mxu0
        %588 = vmatprep.subr.bf16.mxu0 0
        %589 = vmatpush1.bf16.msra.mxu0 %v539
        %590 = vmatprep.subr.bf16.mxu0 0
        %591 = vmatpush1.bf16.msra.mxu0 %v538
        %592 = vmatprep.subr.bf16.mxu0 0
        %593 = vmatpush1.bf16.msra.mxu0 %v537
        %594 = vmatprep.subr.bf16.mxu0 0
        %595 = vmatpush1.bf16.msra.mxu0 %v536
        %596 = vmatprep.subr.bf16.mxu0 0
        %597 = vmatpush1.bf16.msra.mxu0 %v535
        %598 = vmatprep.subr.bf16.mxu0 0
        %599 = vmatpush1.bf16.msra.mxu0 %v534
        %600 = vmatprep.subr.bf16.mxu0 0
        %601 = vmatpush1.bf16.msra.mxu0 %v533
        %602 = vmatprep.subr.bf16.mxu0 0
        %603 = vmatpush1.bf16.msra.mxu0 %v532
        %604 = vmatprep.subr.bf16.mxu0 0
        %605 = vmatpush2.bf16.msra.mxu0 0
        %606 = vmatprep.subr.bf16.mxu0 0
        %607 = vmatpush2.bf16.msra.mxu0 0
        %608 = vmatprep.subr.bf16.mxu0 0
        %609 = vmatpush2.bf16.msra.mxu0 0
        %610 = vmatprep.subr.bf16.mxu0 0
        %611 = vmatpush2.bf16.msra.mxu0 0
        %612 = vmatprep.subr.bf16.mxu0 0
        %613 = vmatpush2.bf16.msra.mxu0 0
        %614 = vmatprep.subr.bf16.mxu0 0
        %615 = vmatpush2.bf16.msra.mxu0 0
        %616 = vmatprep.subr.bf16.mxu0 0
        %617 = vmatpush2.bf16.msra.mxu0 0
        %618 = vmatprep.subr.bf16.mxu0 0
        %619 = vmatpush2.bf16.msra.mxu0 0
        %620 = vmatprep.mubr.bf16.mxu0 0
        %621 = vmatmul.mubr.bf16.gmra.mxu0 %v496
        %v622 = vpop.f32.mrf.mxu0
        %v623 = vadd.f32 %v583, %v622
        %v624 = vpop.f32.mrf.mxu0
        %v625 = vpop.f32.mrf.mxu0
        %v626 = vpop.f32.mrf.mxu0
        %627 = vdwg.mxu0
        %v644 = vunpack.c.l.b16 %v479
        %v645 = vunpack.c.l.b16 %v480
        %v646 = vunpack.c.l.b16 %v481
        %v647 = vunpack.c.l.b16 %v482
        %v648 = vunpack.c.l.b16 %v483
        %v649 = vunpack.c.l.b16 %v484
        %v650 = vunpack.c.l.b16 %v485
        %v651 = vunpack.c.l.b16 %v486
        %v652 = vunpack.c.l.b16 %v487
        %v653 = vunpack.c.l.b16 %v488
        %v654 = vunpack.c.l.b16 %v489
        %v655 = vunpack.c.l.b16 %v490
        %v656 = vunpack.c.l.b16 %v491
        %v657 = vunpack.c.l.b16 %v492
        %v658 = vunpack.c.l.b16 %v493
        %v659 = vunpack.c.l.b16 %v494
        %v660 = vpack.c.b16 %v645, %v644
        %v661 = vpack.c.b16 %v647, %v646
        %v662 = vpack.c.b16 %v649, %v648
        %v663 = vpack.c.b16 %v651, %v650
        %v664 = vpack.c.b16 %v653, %v652
        %v665 = vpack.c.b16 %v655, %v654
        %v666 = vpack.c.b16 %v657, %v656
        %v667 = vpack.c.b16 %v659, %v658
        %676 = vmatprep.subr.bf16.mxu0 0
        %677 = vmatpush1.bf16.msra.mxu0 %v667
        %678 = vmatprep.subr.bf16.mxu0 0
        %679 = vmatpush1.bf16.msra.mxu0 %v666
        %680 = vmatprep.subr.bf16.mxu0 0
        %681 = vmatpush1.bf16.msra.mxu0 %v665
        %682 = vmatprep.subr.bf16.mxu0 0
        %683 = vmatpush1.bf16.msra.mxu0 %v664
        %684 = vmatprep.subr.bf16.mxu0 0
        %685 = vmatpush1.bf16.msra.mxu0 %v663
        %686 = vmatprep.subr.bf16.mxu0 0
        %687 = vmatpush1.bf16.msra.mxu0 %v662
        %688 = vmatprep.subr.bf16.mxu0 0
        %689 = vmatpush1.bf16.msra.mxu0 %v661
        %690 = vmatprep.subr.bf16.mxu0 0
        %691 = vmatpush1.bf16.msra.mxu0 %v660
        %692 = vmatprep.subr.bf16.mxu0 0
        %693 = vmatpush2.bf16.msra.mxu0 0
        %694 = vmatprep.subr.bf16.mxu0 0
        %695 = vmatpush2.bf16.msra.mxu0 0
        %696 = vmatprep.subr.bf16.mxu0 0
        %697 = vmatpush2.bf16.msra.mxu0 0
        %698 = vmatprep.subr.bf16.mxu0 0
        %699 = vmatpush2.bf16.msra.mxu0 0
        %700 = vmatprep.subr.bf16.mxu0 0
        %701 = vmatpush2.bf16.msra.mxu0 0
        %702 = vmatprep.subr.bf16.mxu0 0
        %703 = vmatpush2.bf16.msra.mxu0 0
        %704 = vmatprep.subr.bf16.mxu0 0
        %705 = vmatpush2.bf16.msra.mxu0 0
        %706 = vmatprep.subr.bf16.mxu0 0
        %707 = vmatpush2.bf16.msra.mxu0 0
        %708 = vmatprep.mubr.bf16.mxu0 0
        %709 = vmatmul.mubr.bf16.gmra.mxu0 %v496
        %v710 = vpop.f32.mrf.mxu0
        %v711 = vadd.f32 0.0, %v710
        %v712 = vpop.f32.mrf.mxu0
        %v713 = vpop.f32.mrf.mxu0
        %v714 = vpop.f32.mrf.mxu0
        %715 = vdwg.mxu0
        %v716 = vadd.f32 %v623, %v711
        %v718 = vlaneseq
        %v719 = vshrl.u32 %v718, 7
        %v720 = vsub.s32 0, %v719
        %v721 = vrot.slane %v495, %v720
        %v723 = vadd.f32 %v716, %v721
        %v724 = vand.u32 2147483647, %v723
        %vm725 = vcmp.le.f32.partialorder %v724, 0.7853982
        %vm726 = vcmp.lt.s32.totalorder %v723, 0
        %v727 = vand.u32 %v723, 2139095040
        %v728 = vshrl.u32 %v727, 23
        %v729 = vsub.s32 %v728, 127
        %v730 = vand.u32 2147483647, %v723
        %v731 = vand.u32 %v730, 8388607
        %v732 = vor.u32 %v731, 8388608
        %v733 = vsub.s32 0, %v732
        %v734 = vadd.s32 %v729, 1
        %vm735 = vcmp.gt.s32.totalorder %v734, 0
        %v736 = vsel %vm735, %v734, 0
        %v737 = vshrl.u32 %v736, 5
        %v738 = vand.u32 %v736, 31
        %v739 = vsub.s32 32, %v738
        %v740 = vshrl.u32 683565275, %v739
        %v741 = vshll.u32 683565275, %v738
        %v742 = vshrl.u32 2475754826, %v739
        %v743 = vor.u32 %v741, %v742
        %v744 = vshll.u32 2475754826, %v738
        %v745 = vshrl.u32 2131351028, %v739
        %v746 = vor.u32 %v744, %v745
        %v747 = vshll.u32 2131351028, %v738
        %v748 = vshrl.u32 2102212464, %v739
        %v749 = vor.u32 %v747, %v748
        %v750 = vshll.u32 2102212464, %v738
        %v751 = vshrl.u32 920167782, %v739
        %v752 = vor.u32 %v750, %v751
        %v753 = vshll.u32 920167782, %v738
        %v754 = vshrl.u32 1326507024, %v739
        %v755 = vor.u32 %v753, %v754
        %vm756 = vcmp.lt.s32.totalorder %v737, 1
        %vm757 = vcmp.lt.s32.totalorder %v737, 2
        %vm758 = vcmp.lt.s32.totalorder %v737, 3
        %vm759 = vcmp.lt.s32.totalorder %v737, 4
        %v760 = vsel %vm756, %v740, %v743
        %v761 = vsel %vm759, %v749, 2102212464
        %v762 = vsel %vm758, %v746, %v761
        %v763 = vsel %vm757, %v760, %v762
        %v764 = vsel %vm756, %v743, %v746
        %v765 = vsel %vm759, %v752, 920167782
        %v766 = vsel %vm758, %v749, %v765
        %v767 = vsel %vm757, %v764, %v766
        %v768 = vsel %vm756, %v746, %v749
        %v769 = vsel %vm759, %v755, 1326507024
        %v770 = vsel %vm758, %v752, %v769
        %v771 = vsel %vm757, %v768, %v770
        %v772 = vshll.u32 %v732, 8
        %v773 = vmul.u32.u64.compose %v772, %v771
        %v774 = vextract.low.u32 %v773
        %v775 = vextract.high.u32 %v773
        %v776 = vmul.u32.u64.compose %v772, %v767
        %v777 = vextract.low.u32 %v776
        %v778 = vextract.high.u32 %v776
        %v779 = vmul.u32 %v772, %v763
        %v780 = vadd.s32 %v775, %v777
        %vm781 = vc.u32 %v775, %v777
        %v782 = vadd.s32 %v778, 1
        %v783 = vsel %vm781, %v782, %v778
        %v784 = vadd.s32 %v779, %v783
        %v785 = vadd.s32 %v784, 536870912
        %v786 = vshrl.u32 %v785, 30
        %v787 = vshll.u32 %v786, 30
        %v788 = vsub.s32 %v784, %v787
        %vm789 = vcmp.lt.s32.totalorder %v788, 0
        %v790 = vsub.s32 0, %v788
        %v791 = vsel %vm789, %v790, %v788
        %v792 = vclz %v791
        %v793 = vsub.s32 %v792, 2
        %vm794 = vcmp.gt.s32.totalorder 0, %v793
        %v795 = vsel %vm794, 0, %v793
        %v796 = vsub.s32 32, %v795
        %v797 = vshll.u32 %v788, %v795
        %v798 = vshrl.u32 %v780, %v796
        %v799 = vor.u32 %v797, %v798
        %v800 = vsub.s32 4294967266, %v795
        %v801 = vadd.s32 %v800, 127
        %v802 = vshll.u32 %v801, 23
        %v803 = vor.u32 4788187, %v802
        %v804 = vand.u32 2147483647, %v803
        %v806 = vcvt.s32.f32 %v799
        %v807 = vmul.f32 %v806, %v804
        %v808 = vxor.u32 %v807, 2147483648
        %v809 = vsel %vm726, %v808, %v807
        %v810 = vsub.s32 4, %v786
        %v811 = vsel %vm726, %v810, %v786
        %v812 = vsel %vm725, %v723, %v809
        %v813 = vsel %vm725, 0, %v811
        %v814 = vcosq.f32.pop %v812
        %v815 = vsinq.f32.pop %v812
        %vm816 = vweird.f32 %v723
        %v817 = vadd.s32 %v813, 3
        %v818 = vand.u32 %v817, 3
        %vm819 = vcmp.lt.s32.totalorder %v818, 2
        %vm820 = vcmp.eq.s32.totalorder %v818, 0
        %v821 = vxor.u32 %v815, 2147483648
        %v822 = vsel %vm820, %v814, %v821
        %vm823 = vcmp.eq.s32.totalorder %v818, 2
        %v824 = vxor.u32 %v814, 2147483648
        %v825 = vsel %vm823, %v824, %v815
        %v826 = vsel %vm819, %v822, %v825
        %v827 = vsel %vm816, nan, %v826
        %v828 = vld [vmem:[%s6] sm:$0xf]
        %v829 = vld [vmem:[%s6 + $0x4] sm:$0xf]
        %v830 = vld [vmem:[%s6 + $0x8] sm:$0xf]
        %v831 = vld [vmem:[%s6 + $0xc] sm:$0xf]
        %v832 = vld [vmem:[%s6 + $0x10] sm:$0xf]
        %v833 = vld [vmem:[%s6 + $0x14] sm:$0xf]
        %v834 = vld [vmem:[%s6 + $0x18] sm:$0xf]
        %v835 = vld [vmem:[%s6 + $0x1c] sm:$0xf]
        %v836 = vld [vmem:[%s6 + $0x20] sm:$0xf]
        %v837 = vld [vmem:[%s6 + $0x24] sm:$0xf]
        %v838 = vld [vmem:[%s6 + $0x28] sm:$0xf]
        %v839 = vld [vmem:[%s6 + $0x2c] sm:$0xf]
        %v840 = vld [vmem:[%s6 + $0x30] sm:$0xf]
        %v841 = vld [vmem:[%s6 + $0x34] sm:$0xf]
        %v842 = vld [vmem:[%s6 + $0x38] sm:$0xf]
        %v843 = vld [vmem:[%s6 + $0x3c] sm:$0xf]
        %v844 = vld [vmem:[%s7] sm:$0xf]
        %v845 = vld [vmem:[%s7 + $0x4] sm:$0xf]
        %v846 = vld [vmem:[%s7 + $0x8] sm:$0xf]
        %v847 = vld [vmem:[%s7 + $0xc] sm:$0xf]
        %v848 = vld [vmem:[%s7 + $0x10] sm:$0xf]
        %v849 = vld [vmem:[%s7 + $0x14] sm:$0xf]
        %v850 = vld [vmem:[%s7 + $0x18] sm:$0xf]
        %v851 = vld [vmem:[%s7 + $0x1c] sm:$0xf]
        %v852 = vld [vmem:[%s7 + $0x20] sm:$0xf]
        %v853 = vld [vmem:[%s7 + $0x24] sm:$0xf]
        %v854 = vld [vmem:[%s7 + $0x28] sm:$0xf]
        %v855 = vld [vmem:[%s7 + $0x2c] sm:$0xf]
        %v856 = vld [vmem:[%s7 + $0x30] sm:$0xf]
        %v857 = vld [vmem:[%s7 + $0x34] sm:$0xf]
        %v858 = vld [vmem:[%s7 + $0x38] sm:$0xf]
        %v859 = vld [vmem:[%s7 + $0x3c] sm:$0xf]
        %v860 = vld [vmem:[%s8] sm:$0x1]
        %v861 = vpack.c.bf16 %v827, %v827
        %v862 = vunpack.c.l.bf16 %v861
        %v863 = vsub.f32 %v827, %v862
        %v864 = vpack.c.bf16 %v863, %v863
        %v881 = vunpack.c.l.b16 %v828
        %v882 = vunpack.c.l.b16 %v829
        %v883 = vunpack.c.l.b16 %v830
        %v884 = vunpack.c.l.b16 %v831
        %v885 = vunpack.c.l.b16 %v832
        %v886 = vunpack.c.l.b16 %v833
        %v887 = vunpack.c.l.b16 %v834
        %v888 = vunpack.c.l.b16 %v835
        %v889 = vunpack.c.l.b16 %v836
        %v890 = vunpack.c.l.b16 %v837
        %v891 = vunpack.c.l.b16 %v838
        %v892 = vunpack.c.l.b16 %v839
        %v893 = vunpack.c.l.b16 %v840
        %v894 = vunpack.c.l.b16 %v841
        %v895 = vunpack.c.l.b16 %v842
        %v896 = vunpack.c.l.b16 %v843
        %v897 = vpack.c.b16 %v882, %v881
        %v898 = vpack.c.b16 %v884, %v883
        %v899 = vpack.c.b16 %v886, %v885
        %v900 = vpack.c.b16 %v888, %v887
        %v901 = vpack.c.b16 %v890, %v889
        %v902 = vpack.c.b16 %v892, %v891
        %v903 = vpack.c.b16 %v894, %v893
        %v904 = vpack.c.b16 %v896, %v895
        %913 = vmatprep.subr.bf16.mxu0 0
        %914 = vmatpush1.bf16.msra.mxu0 %v904
        %915 = vmatprep.subr.bf16.mxu0 0
        %916 = vmatpush1.bf16.msra.mxu0 %v903
        %917 = vmatprep.subr.bf16.mxu0 0
        %918 = vmatpush1.bf16.msra.mxu0 %v902
        %919 = vmatprep.subr.bf16.mxu0 0
        %920 = vmatpush1.bf16.msra.mxu0 %v901
        %921 = vmatprep.subr.bf16.mxu0 0
        %922 = vmatpush1.bf16.msra.mxu0 %v900
        %923 = vmatprep.subr.bf16.mxu0 0
        %924 = vmatpush1.bf16.msra.mxu0 %v899
        %925 = vmatprep.subr.bf16.mxu0 0
        %926 = vmatpush1.bf16.msra.mxu0 %v898
        %927 = vmatprep.subr.bf16.mxu0 0
        %928 = vmatpush1.bf16.msra.mxu0 %v897
        %929 = vmatprep.subr.bf16.mxu0 0
        %930 = vmatpush2.bf16.msra.mxu0 0
        %931 = vmatprep.subr.bf16.mxu0 0
        %932 = vmatpush2.bf16.msra.mxu0 0
        %933 = vmatprep.subr.bf16.mxu0 0
        %934 = vmatpush2.bf16.msra.mxu0 0
        %935 = vmatprep.subr.bf16.mxu0 0
        %936 = vmatpush2.bf16.msra.mxu0 0
        %937 = vmatprep.subr.bf16.mxu0 0
        %938 = vmatpush2.bf16.msra.mxu0 0
        %939 = vmatprep.subr.bf16.mxu0 0
        %940 = vmatpush2.bf16.msra.mxu0 0
        %941 = vmatprep.subr.bf16.mxu0 0
        %942 = vmatpush2.bf16.msra.mxu0 0
        %943 = vmatprep.subr.bf16.mxu0 0
        %944 = vmatpush2.bf16.msra.mxu0 0
        %945 = vmatprep.mubr.bf16.mxu0 0
        %946 = vmatmul.mubr.bf16.gmra.mxu0 %v864
        %v947 = vpop.f32.mrf.mxu0
        %v948 = vadd.f32 0.0, %v947
        %v949 = vpop.f32.mrf.mxu0
        %v950 = vpop.f32.mrf.mxu0
        %v951 = vpop.f32.mrf.mxu0
        %952 = vdwg.mxu0
        %953 = vmatprep.subr.bf16.mxu0 0
        %954 = vmatpush1.bf16.msra.mxu0 %v904
        %955 = vmatprep.subr.bf16.mxu0 0
        %956 = vmatpush1.bf16.msra.mxu0 %v903
        %957 = vmatprep.subr.bf16.mxu0 0
        %958 = vmatpush1.bf16.msra.mxu0 %v902
        %959 = vmatprep.subr.bf16.mxu0 0
        %960 = vmatpush1.bf16.msra.mxu0 %v901
        %961 = vmatprep.subr.bf16.mxu0 0
        %962 = vmatpush1.bf16.msra.mxu0 %v900
        %963 = vmatprep.subr.bf16.mxu0 0
        %964 = vmatpush1.bf16.msra.mxu0 %v899
        %965 = vmatprep.subr.bf16.mxu0 0
        %966 = vmatpush1.bf16.msra.mxu0 %v898
        %967 = vmatprep.subr.bf16.mxu0 0
        %968 = vmatpush1.bf16.msra.mxu0 %v897
        %969 = vmatprep.subr.bf16.mxu0 0
        %970 = vmatpush2.bf16.msra.mxu0 0
        %971 = vmatprep.subr.bf16.mxu0 0
        %972 = vmatpush2.bf16.msra.mxu0 0
        %973 = vmatprep.subr.bf16.mxu0 0
        %974 = vmatpush2.bf16.msra.mxu0 0
        %975 = vmatprep.subr.bf16.mxu0 0
        %976 = vmatpush2.bf16.msra.mxu0 0
        %977 = vmatprep.subr.bf16.mxu0 0
        %978 = vmatpush2.bf16.msra.mxu0 0
        %979 = vmatprep.subr.bf16.mxu0 0
        %980 = vmatpush2.bf16.msra.mxu0 0
        %981 = vmatprep.subr.bf16.mxu0 0
        %982 = vmatpush2.bf16.msra.mxu0 0
        %983 = vmatprep.subr.bf16.mxu0 0
        %984 = vmatpush2.bf16.msra.mxu0 0
        %985 = vmatprep.mubr.bf16.mxu0 0
        %986 = vmatmul.mubr.bf16.gmra.mxu0 %v861
        %v987 = vpop.f32.mrf.mxu0
        %v988 = vadd.f32 %v948, %v987
        %v989 = vpop.f32.mrf.mxu0
        %v990 = vpop.f32.mrf.mxu0
        %v991 = vpop.f32.mrf.mxu0
        %992 = vdwg.mxu0
        %v1009 = vunpack.c.l.b16 %v844
        %v1010 = vunpack.c.l.b16 %v845
        %v1011 = vunpack.c.l.b16 %v846
        %v1012 = vunpack.c.l.b16 %v847
        %v1013 = vunpack.c.l.b16 %v848
        %v1014 = vunpack.c.l.b16 %v849
        %v1015 = vunpack.c.l.b16 %v850
        %v1016 = vunpack.c.l.b16 %v851
        %v1017 = vunpack.c.l.b16 %v852
        %v1018 = vunpack.c.l.b16 %v853
        %v1019 = vunpack.c.l.b16 %v854
        %v1020 = vunpack.c.l.b16 %v855
        %v1021 = vunpack.c.l.b16 %v856
        %v1022 = vunpack.c.l.b16 %v857
        %v1023 = vunpack.c.l.b16 %v858
        %v1024 = vunpack.c.l.b16 %v859
        %v1025 = vpack.c.b16 %v1010, %v1009
        %v1026 = vpack.c.b16 %v1012, %v1011
        %v1027 = vpack.c.b16 %v1014, %v1013
        %v1028 = vpack.c.b16 %v1016, %v1015
        %v1029 = vpack.c.b16 %v1018, %v1017
        %v1030 = vpack.c.b16 %v1020, %v1019
        %v1031 = vpack.c.b16 %v1022, %v1021
        %v1032 = vpack.c.b16 %v1024, %v1023
        %1041 = vmatprep.subr.bf16.mxu0 0
        %1042 = vmatpush1.bf16.msra.mxu0 %v1032
        %1043 = vmatprep.subr.bf16.mxu0 0
        %1044 = vmatpush1.bf16.msra.mxu0 %v1031
        %1045 = vmatprep.subr.bf16.mxu0 0
        %1046 = vmatpush1.bf16.msra.mxu0 %v1030
        %1047 = vmatprep.subr.bf16.mxu0 0
        %1048 = vmatpush1.bf16.msra.mxu0 %v1029
        %1049 = vmatprep.subr.bf16.mxu0 0
        %1050 = vmatpush1.bf16.msra.mxu0 %v1028
        %1051 = vmatprep.subr.bf16.mxu0 0
        %1052 = vmatpush1.bf16.msra.mxu0 %v1027
        %1053 = vmatprep.subr.bf16.mxu0 0
        %1054 = vmatpush1.bf16.msra.mxu0 %v1026
        %1055 = vmatprep.subr.bf16.mxu0 0
        %1056 = vmatpush1.bf16.msra.mxu0 %v1025
        %1057 = vmatprep.subr.bf16.mxu0 0
        %1058 = vmatpush2.bf16.msra.mxu0 0
        %1059 = vmatprep.subr.bf16.mxu0 0
        %1060 = vmatpush2.bf16.msra.mxu0 0
        %1061 = vmatprep.subr.bf16.mxu0 0
        %1062 = vmatpush2.bf16.msra.mxu0 0
        %1063 = vmatprep.subr.bf16.mxu0 0
        %1064 = vmatpush2.bf16.msra.mxu0 0
        %1065 = vmatprep.subr.bf16.mxu0 0
        %1066 = vmatpush2.bf16.msra.mxu0 0
        %1067 = vmatprep.subr.bf16.mxu0 0
        %1068 = vmatpush2.bf16.msra.mxu0 0
        %1069 = vmatprep.subr.bf16.mxu0 0
        %1070 = vmatpush2.bf16.msra.mxu0 0
        %1071 = vmatprep.subr.bf16.mxu0 0
        %1072 = vmatpush2.bf16.msra.mxu0 0
        %1073 = vmatprep.mubr.bf16.mxu0 0
        %1074 = vmatmul.mubr.bf16.gmra.mxu0 %v861
        %v1075 = vpop.f32.mrf.mxu0
        %v1076 = vadd.f32 0.0, %v1075
        %v1077 = vpop.f32.mrf.mxu0
        %v1078 = vpop.f32.mrf.mxu0
        %v1079 = vpop.f32.mrf.mxu0
        %1080 = vdwg.mxu0
        %v1081 = vadd.f32 %v988, %v1076
        %v1083 = vlaneseq
        %v1084 = vshrl.u32 %v1083, 7
        %v1085 = vsub.s32 0, %v1084
        %v1086 = vrot.slane %v860, %v1085
        %v1088 = vadd.f32 %v1081, %v1086
        %vm1089 = vcmask 130048
        %1090 = vst.msk [vmem:[%s323] sm:$0xff] %vm1089, %v1088
        %s1091 = sand.u32 %s225, 1
        %s1092 = scalar_lea.sflag [#allocation3], %s1091
        %s1093 = sand.u32 %s225, 1
        %s1094 = smul.addr %s1093, 8
        %s1095 = scalar_lea.vmem [#allocation2], %s1094
        // Predicated region
        $region57: #{tpu_custom_call.1} parent=55 // pred_check
          %p1096 = pneg %p235
        $region58: #{tpu_custom_call.1} parent=55 // pred_check_branch
          %1098 = sbr.rel (%p1096) target = $region60
        $region59: #{tpu_custom_call.1} parent=55 // pred_region
          %s1100 = ssub.s32 128, 128
          %1101 = vsyncadd %s1092, %s1100
          %s1102 = smul.addr %s23, 128
          %s1103 = scalar_lea.hbm %s9, %s1102
          %s1105 = sshll.u32 %s1095, 4
          %s1106 = int_to_ptr.vmem [resolvable:$true] %s1105
          %1108 = dma.vmem_to_hbm [thread:$0]  %s1106, 128, %s1103, %s1092
        $region60: #{tpu_custom_call.1} parent=55 // pred_fallthru
          _
      $region56: #{tpu_custom_call.1} parent=5 // pred_fallthru
        _
      %p1109 = scmp.le.s32.totalorder 2, %s18
      // Predicated region
      $region61: #{tpu_custom_call.1} parent=5 // pred_check
        %p1110 = pneg %p1109
      $region62: #{tpu_custom_call.1} parent=5 // pred_check_branch
        %1112 = sbr.rel (%p1110) target = $region64
      $region63: #{tpu_custom_call.1} parent=5 // pred_region
        %s1113 = ssub.s32 %s18, 2
        // Predicated region
        $region65: #{tpu_custom_call.1} parent=63 // pred_check
          %p1114 = pneg %p241
        $region66: #{tpu_custom_call.1} parent=63 // pred_check_branch
          %1116 = sbr.rel (%p1114) target = $region68
        $region67: #{tpu_custom_call.1} parent=63 // pred_region
          %s1117 = sand.u32 %s226, 1
          %s1118 = scalar_lea.sflag [#allocation3], %s1117
          %s1119 = sand.u32 %s226, 1
          %s1120 = smul.addr %s1119, 8
          %s1121 = scalar_lea.vmem [#allocation2], %s1120
          %1122 = dma.done %s1118, 128
        $region68: #{tpu_custom_call.1} parent=63 // pred_fallthru
          _
      $region64: #{tpu_custom_call.1} parent=5 // pred_fallthru
        _
    $region6: #{tpu_custom_call.1} parent=1 // loop_footer
      %s22 = sadd.s32 1, %s18
    $region7: #{tpu_custom_call.1} parent=1 // loop_footer_branch
      %17 = sbr.rel target = $region3
    $region8: #{tpu_custom_call.1} parent=1 // loop_exit
      _
    %1123 = vsyncpa [#allocation3], 1
    %s1124 = scalar_lea.sflag [#allocation3], 1
    %1125 = vsyncpa %s1124, 1

</llo_original>
